<compile_context>
chip_gen: v5e
topology: v5e:2x2
jax: 0.10.0
libtpu: 0.0.40
codegen_flags: <defaults>
</compile_context>

<pallas_src>
import jax
import jax.numpy as jnp
from jax.experimental import pallas as pl
from jax.experimental.pallas import tpu as pltpu


def mul_kernel(params_ref, x_ref, o_ref):
    # params_ref (SMEM, f32[6]): [w00, w01, w10, w11, b0, b1]
    # with the weight stored as w[in, out] (transpose of PyTorch's (out, in)).
    w00 = params_ref[0]
    w01 = params_ref[1]
    w10 = params_ref[2]
    w11 = params_ref[3]
    b0 = params_ref[4]
    b1 = params_ref[5]

    x0 = x_ref[:, 0:1]          # (B, 1)
    x1 = x_ref[:, 1:2]          # (B, 1)

    # h = squeeze1(x)  — VPU FMAs with scalar-broadcast weights.
    h0 = x0 * w00 + x1 * w10 + b0
    h1 = x0 * w01 + x1 * w11 + b1

    # y = squeeze1(h)  — same (weight-tied) layer applied again.
    y0 = h0 * w00 + h1 * w10 + b0
    y1 = h0 * w01 + h1 * w11 + b1

    # out = h * y
    o_ref[:, 0:1] = (h0 * y0).astype(o_ref.dtype)
    o_ref[:, 1:2] = (h1 * y1).astype(o_ref.dtype)


def mul_forward(x, w, b):
    """x: (B, 2) f32, w: (2, 2) f32 stored as (in, out), b: (2,) f32 -> (B, 2)."""
    B, F = x.shape
    # Pack the 4 weight scalars + 2 bias scalars into one SMEM operand.
    params = jnp.concatenate([w.reshape(-1), b.reshape(-1)]).astype(jnp.float32)
    return pl.pallas_call(
        mul_kernel,
        out_shape=jax.ShapeDtypeStruct((B, F), x.dtype),
        in_specs=[
            pl.BlockSpec(memory_space=pltpu.MemorySpace.SMEM),  # params (scalars)
            pl.BlockSpec((B, F), lambda: (0, 0)),               # x, full-array block
        ],
        out_specs=pl.BlockSpec((B, F), lambda: (0, 0)),
    )(params, x)


def reference(x, w, b):
    h = x @ w + b
    y = h @ w + b
    return h * y


if __name__ == "__main__":
    key = jax.random.PRNGKey(0)
    kx, kw, kb = jax.random.split(key, 3)

    batch = 8
    feat = 2  # nn.Linear(2, 2)

    x = jax.random.normal(kx, (batch, feat), dtype=jnp.float32)
    # Deterministic synthetic parameters (mirrors Linear(2, 2) shapes);
    # stored as (in, out) = transpose of PyTorch's weight layout.
    w = jax.random.uniform(kw, (feat, feat), dtype=jnp.float32,
                           minval=-0.7, maxval=0.7)
    b = jax.random.uniform(kb, (feat,), dtype=jnp.float32,
                           minval=-0.7, maxval=0.7)

    out = mul_forward(x, w, b)
    out = jax.block_until_ready(out)

    ref = reference(x, w, b)
    assert out.shape == (batch, feat)
    assert jnp.allclose(out, ref, atol=1e-5, rtol=1e-5)

    print("KERNEL_OK")
</pallas_src>

<mosaic_0001>
module attributes {stable_mosaic.version = 11 : i64} {
  func.func @mul_kernel(%arg0: memref<6xf32, #tpu.memory_space<smem>>, %arg1: memref<8x2xf32, #tpu.memory_space<vmem>>, %arg2: memref<8x2xf32, #tpu.memory_space<vmem>>) attributes {dimension_semantics = [], scalar_prefetch = 0 : i64, scratch_operands = 0 : i64, tpu.core_type = #tpu.core_type<tc>} {
    %c0 = arith.constant 0 : index
    %0 = memref.load %arg0[%c0] : memref<6xf32, #tpu.memory_space<smem>>
    %c1 = arith.constant 1 : index
    %1 = memref.load %arg0[%c1] : memref<6xf32, #tpu.memory_space<smem>>
    %c2 = arith.constant 2 : index
    %2 = memref.load %arg0[%c2] : memref<6xf32, #tpu.memory_space<smem>>
    %c3 = arith.constant 3 : index
    %3 = memref.load %arg0[%c3] : memref<6xf32, #tpu.memory_space<smem>>
    %c4 = arith.constant 4 : index
    %4 = memref.load %arg0[%c4] : memref<6xf32, #tpu.memory_space<smem>>
    %c5 = arith.constant 5 : index
    %5 = memref.load %arg0[%c5] : memref<6xf32, #tpu.memory_space<smem>>
    %c0_0 = arith.constant 0 : index
    %c0_1 = arith.constant 0 : index
    %6 = vector.load %arg1[%c0_0, %c0_1] : memref<8x2xf32, #tpu.memory_space<vmem>>, vector<8x1xf32>
    %c0_2 = arith.constant 0 : index
    %c1_3 = arith.constant 1 : index
    %7 = vector.load %arg1[%c0_2, %c1_3] : memref<8x2xf32, #tpu.memory_space<vmem>>, vector<8x1xf32>
    %8 = vector.broadcast %0 : f32 to vector<8x1xf32>
    %9 = arith.mulf %6, %8 : vector<8x1xf32>
    %10 = vector.broadcast %2 : f32 to vector<8x1xf32>
    %11 = arith.mulf %7, %10 : vector<8x1xf32>
    %12 = arith.addf %9, %11 : vector<8x1xf32>
    %13 = vector.broadcast %4 : f32 to vector<8x1xf32>
    %14 = arith.addf %12, %13 : vector<8x1xf32>
    %15 = vector.broadcast %1 : f32 to vector<8x1xf32>
    %16 = arith.mulf %6, %15 : vector<8x1xf32>
    %17 = vector.broadcast %3 : f32 to vector<8x1xf32>
    %18 = arith.mulf %7, %17 : vector<8x1xf32>
    %19 = arith.addf %16, %18 : vector<8x1xf32>
    %20 = vector.broadcast %5 : f32 to vector<8x1xf32>
    %21 = arith.addf %19, %20 : vector<8x1xf32>
    %22 = vector.broadcast %0 : f32 to vector<8x1xf32>
    %23 = arith.mulf %14, %22 : vector<8x1xf32>
    %24 = vector.broadcast %2 : f32 to vector<8x1xf32>
    %25 = arith.mulf %21, %24 : vector<8x1xf32>
    %26 = arith.addf %23, %25 : vector<8x1xf32>
    %27 = vector.broadcast %4 : f32 to vector<8x1xf32>
    %28 = arith.addf %26, %27 : vector<8x1xf32>
    %29 = vector.broadcast %1 : f32 to vector<8x1xf32>
    %30 = arith.mulf %14, %29 : vector<8x1xf32>
    %31 = vector.broadcast %3 : f32 to vector<8x1xf32>
    %32 = arith.mulf %21, %31 : vector<8x1xf32>
    %33 = arith.addf %30, %32 : vector<8x1xf32>
    %34 = vector.broadcast %5 : f32 to vector<8x1xf32>
    %35 = arith.addf %33, %34 : vector<8x1xf32>
    %36 = arith.mulf %14, %28 : vector<8x1xf32>
    %c0_4 = arith.constant 0 : index
    %c0_5 = arith.constant 0 : index
    %37 = vector.load %arg2[%c0_4, %c0_5] : memref<8x2xf32, #tpu.memory_space<vmem>>, vector<8x1xf32>
    tpu.vector_store %arg2[%c0_4, %c0_5], %36 {strides = array<i32>} : memref<8x2xf32, #tpu.memory_space<vmem>>, vector<8x1xf32>,
    %38 = arith.mulf %21, %35 : vector<8x1xf32>
    %c0_6 = arith.constant 0 : index
    %c1_7 = arith.constant 1 : index
    %39 = vector.load %arg2[%c0_6, %c1_7] : memref<8x2xf32, #tpu.memory_space<vmem>>, vector<8x1xf32>
    tpu.vector_store %arg2[%c0_6, %c1_7], %38 {strides = array<i32>} : memref<8x2xf32, #tpu.memory_space<vmem>>, vector<8x1xf32>,
    return
  }
}

</mosaic_0001>

<llo_original>
// kernel: tpu_custom_call.1
$region0: #{tpu_custom_call.1}
  #allocation0 [shape = 'u32[]', space=smem, size = 0x4, offset = 0x4, fixed_abs, tag = 'smem constant byte address 0x4 - core index']
  #allocation1 [shape = 'u32[72,128]{1,0:T(1,128)}', space=vmem, size = 0x9000, scoped, tag = 'internal scratch']
  %s0 = inlined_call_operand.vmem [shape: f32[6], index: 0, kind: input, shape index: {}]
  %s1 = inlined_call_operand.vmem [shape: f32[8,2], index: 1, kind: input, shape index: {}]
  %s2 = inlined_call_operand.vmem [shape: f32[8,2], index: 2, kind: output, shape index: {}]
  %s3 = sld [smem:[#allocation0]]
  $region22: #{tpu_custom_call.1} parent=0
    _
  %s5 = ssub.s32 1, %s3
  %s6 = scalar_select 0, %s5, %s3
  $region1: #{tpu_custom_call.1} parent=0
    #allocation2 [shape = 'u8[512]{0}', space=smem, size = 0x200, scoped, tag = 'input window, operand 0, single buffered']
    #allocation3 [shape = 's32[1]{0}', space=sflag, size = 0x4, scoped, tag = 'scoped memory for tpu_custom_call.1']
    %7 = vsyncpa [#allocation3], 0
    // Predicated region
    $region2: #{tpu_custom_call.1} parent=1 // pred_check
      _
    $region3: #{tpu_custom_call.1} parent=1 // pred_check_branch
      %9 = sbr.rel (0) target = $region5
    $region4: #{tpu_custom_call.1} parent=1 // pred_region
      %11 = vsyncadd [#allocation3], 0
      %s13 = sshll.u32 %s0, 4
      %s14 = int_to_ptr.vmem [resolvable:$true] %s13
      %16 = dma.vmem_to_smem %s14, 16, [#allocation2], [#allocation3]
    $region5: #{tpu_custom_call.1} parent=1 // pred_fallthru
      _
    // Predicated region
    $region6: #{tpu_custom_call.1} parent=1 // pred_check
      _
    $region7: #{tpu_custom_call.1} parent=1 // pred_check_branch
      %18 = sbr.rel (0) target = $region9
    $region8: #{tpu_custom_call.1} parent=1 // pred_region
      _
    $region9: #{tpu_custom_call.1} parent=1 // pred_fallthru
      _
    // Predicated region
    $region10: #{tpu_custom_call.1} parent=1 // pred_check
      _
    $region11: #{tpu_custom_call.1} parent=1 // pred_check_branch
      %20 = sbr.rel (0) target = $region13
    $region12: #{tpu_custom_call.1} parent=1 // pred_region
      %22 = dma.done [#allocation3], 16
    $region13: #{tpu_custom_call.1} parent=1 // pred_fallthru
      _
    %23 = sfence
    %s24 = sld [smem:[#allocation2]]
    %s25 = sld [smem:[#allocation2 + $0x1]]
    %s26 = sld [smem:[#allocation2 + $0x2]]
    %s27 = sld [smem:[#allocation2 + $0x3]]
    %s28 = sld [smem:[#allocation2 + $0x4]]
    %s29 = sld [smem:[#allocation2 + $0x5]]
    %v30 = vld [vmem:[%s1] sm:$0xff]
    %v31 = vstv %s24
    %v32 = vmul.f32 %v30, %v31
    %v33 = vstv %s26
    %v34 = vmul.f32 %v30, %v33
    %36 = vrot.lane.b32.xlu0 %v34, 127
    %v37 = vpop.permute.xlu0 %36
    %v39 = vadd.f32 %v32, %v37
    %v40 = vstv %s28
    %v41 = vadd.f32 %v39, %v40
    %v42 = vstv %s25
    %v43 = vmul.f32 %v30, %v42
    %v44 = vstv %s27
    %v45 = vmul.f32 %v30, %v44
    %47 = vrot.lane.b32.xlu0 %v45, 127
    %v48 = vpop.permute.xlu0 %47
    %v50 = vadd.f32 %v43, %v48
    %v51 = vstv %s29
    %v52 = vadd.f32 %v50, %v51
    %v53 = vmul.f32 %v41, %v31
    %v54 = vmul.f32 %v52, %v33
    %v55 = vadd.f32 %v53, %v54
    %v56 = vadd.f32 %v55, %v40
    %v57 = vmul.f32 %v41, %v42
    %v58 = vmul.f32 %v52, %v44
    %v59 = vadd.f32 %v57, %v58
    %v60 = vadd.f32 %v59, %v51
    %v61 = vmul.f32 %v41, %v56
    %vm62 = vcmask 7168
    %63 = vst.msk [vmem:[%s2] sm:$0xff] %vm62, %v61
    %v64 = vmul.f32 %v52, %v60
    %66 = vrot.lane.b32.xlu0 %v64, 1
    %v67 = vpop.permute.xlu0 %66
    %vm69 = vcmask 15368
    %70 = vst.msk [vmem:[%s2] sm:$0xff] %vm69, %v67
    // Predicated region
    $region14: #{tpu_custom_call.1} parent=1 // pred_check
      _
    $region15: #{tpu_custom_call.1} parent=1 // pred_check_branch
      %72 = sbr.rel (0) target = $region17
    $region16: #{tpu_custom_call.1} parent=1 // pred_region
      _
    $region17: #{tpu_custom_call.1} parent=1 // pred_fallthru
      _
    // Predicated region
    $region18: #{tpu_custom_call.1} parent=1 // pred_check
      _
    $region19: #{tpu_custom_call.1} parent=1 // pred_check_branch
      %74 = sbr.rel (0) target = $region21
    $region20: #{tpu_custom_call.1} parent=1 // pred_region
      _
    $region21: #{tpu_custom_call.1} parent=1 // pred_fallthru
      _
    %75 = vsyncpa [#allocation3], 1

</llo_original>
